<compile_context>
chip_gen: v5e
topology: v5e:2x2
jax: 0.10.0
libtpu: 0.0.40
codegen_flags: <defaults>
</compile_context>

<pallas_src>
import math
from functools import partial

import numpy as np
import jax
import jax.numpy as jnp
from jax.experimental import pallas as pl
from jax.experimental.pallas import tpu as pltpu

F32 = jnp.float32
BF16 = jnp.bfloat16
VMEM_SPEC = pl.BlockSpec(memory_space=pltpu.MemorySpace.VMEM)
PARALLEL_1D = pltpu.CompilerParams(dimension_semantics=("parallel",))

# ------------------------------------------------------------------
# Model configuration (small synthetic SAM)
# ------------------------------------------------------------------
CFG = dict(
    img_size=32, patch_size=8, in_chans=3,
    enc_embed_dim=32, enc_depth=2, enc_num_heads=2, enc_mlp_ratio=2,
    out_chans=32,                      # prompt / decoder embedding dim
    dec_num_heads=2, dec_mlp_dim=64, dec_depth=2,
    num_multimask_outputs=3, iou_head_hidden_dim=32,
)
PIXEL_MEAN = jnp.array([123.675, 116.28, 103.53], F32)
PIXEL_STD = jnp.array([58.395, 57.12, 57.375], F32)


# ------------------------------------------------------------------
# Small helpers used INSIDE Pallas kernels
# ------------------------------------------------------------------
def _mm(x, w):
    """bf16 MXU matmul with f32 accumulation."""
    return jnp.dot(x.astype(BF16), w.astype(BF16), preferred_element_type=jnp.float32)


def _ln(x, w, b, eps):
    mu = jnp.mean(x, axis=-1, keepdims=True)
    xc = x - mu
    var = jnp.mean(xc * xc, axis=-1, keepdims=True)
    inv = jax.lax.rsqrt(var + eps)
    return xc * inv * w + b


_SQRT1_2 = 0.7071067811865476


def _erf_poly(x):
    # Abramowitz & Stegun 7.1.26 (|err| < 1.5e-7): f32-accurate erf using only
    # VPU/EUP-friendly ops so the exact-GELU stays inside the kernel.
    a1, a2, a3, a4, a5 = 0.254829592, -0.284496736, 1.421413741, -1.453152027, 1.061405429
    p = 0.3275911
    ax = jnp.abs(x)
    t = 1.0 / (1.0 + p * ax)
    poly = ((((a5 * t + a4) * t + a3) * t + a2) * t + a1) * t
    y = 1.0 - poly * jnp.exp(-ax * ax)
    return jnp.where(x >= 0, y, -y)


def _gelu(x):
    return 0.5 * x * (1.0 + _erf_poly(x * _SQRT1_2))


def _apply_act(x, act):
    if act == "relu":
        return jnp.maximum(x, 0.0)
    if act == "gelu":
        return _gelu(x)
    return x


def _mha(q, k, v, num_heads):
    """Multi-head attention on (Nq, ci), (Nk, ci) with head split done in-kernel."""
    ci = q.shape[-1]
    hd = ci // num_heads
    scale = 1.0 / math.sqrt(hd)
    outs = []
    for h in range(num_heads):
        sl = slice(h * hd, (h + 1) * hd)
        qh = (q[:, sl] * scale).astype(BF16)
        kh = k[:, sl].astype(BF16)
        vh = v[:, sl].astype(BF16)
        s = jax.lax.dot_general(qh, kh, (((1,), (1,)), ((), ())),
                                preferred_element_type=jnp.float32)
        s = s - jnp.max(s, axis=-1, keepdims=True)
        p = jnp.exp(s)
        p = p * pl.reciprocal(jnp.sum(p, axis=-1, keepdims=True), approx=True)
        outs.append(jnp.dot(p.astype(BF16), vh, preferred_element_type=jnp.float32))
    return jnp.concatenate(outs, axis=-1)


def _proj_attn(q_in, k_in, v_in, qkv_w, qkv_b, o_w, o_b, num_heads):
    q = _mm(q_in, qkv_w[0]) + qkv_b[0]
    k = _mm(k_in, qkv_w[1]) + qkv_b[1]
    v = _mm(v_in, qkv_w[2]) + qkv_b[2]
    out = _mha(q, k, v, num_heads)
    return _mm(out, o_w) + o_b


def _w_spec(arr):
    """Full-array BlockSpec (same block for every grid step)."""
    nd = arr.ndim
    return pl.BlockSpec(arr.shape, lambda *_, _n=nd: (0,) * _n)


# ------------------------------------------------------------------
# Generic small kernels (used where fusion is not worthwhile)
# ------------------------------------------------------------------
def _linear_kernel(act, has_bias, x_ref, w_ref, *rest):
    if has_bias:
        b_ref, o_ref = rest
    else:
        (o_ref,) = rest
    y = _mm(x_ref[...], w_ref[...])
    if has_bias:
        y = y + b_ref[...]
    o_ref[...] = _apply_act(y, act).astype(o_ref.dtype)


def pallas_linear(x, w, b=None, act="none"):
    """x: (..., K) @ w: (K, N) (+ b) (+ activation) in one Pallas call."""
    K, N = w.shape
    lead = x.shape[:-1]
    x2 = x.reshape(-1, K).astype(F32)
    args = [x2, w.astype(F32)]
    in_specs = [VMEM_SPEC, VMEM_SPEC]
    if b is not None:
        args.append(b.reshape(1, N).astype(F32))
        in_specs.append(VMEM_SPEC)
    out = pl.pallas_call(
        partial(_linear_kernel, act, b is not None),
        out_shape=jax.ShapeDtypeStruct((x2.shape[0], N), F32),
        in_specs=in_specs,
        out_specs=VMEM_SPEC,
    )(*args)
    return out.reshape(lead + (N,))


def _layernorm_kernel(eps, act, x_ref, w_ref, b_ref, o_ref):
    x = x_ref[...].astype(jnp.float32)
    y = _ln(x, w_ref[...], b_ref[...], eps)
    o_ref[...] = _apply_act(y, act).astype(o_ref.dtype)


def pallas_layernorm(x, w, b, eps=1e-5, act="none"):
    D = x.shape[-1]
    lead = x.shape[:-1]
    x2 = x.reshape(-1, D).astype(F32)
    out = pl.pallas_call(
        partial(_layernorm_kernel, eps, act),
        out_shape=jax.ShapeDtypeStruct(x2.shape, F32),
        in_specs=[VMEM_SPEC, VMEM_SPEC, VMEM_SPEC],
        out_specs=VMEM_SPEC,
    )(x2, w.reshape(1, D).astype(F32), b.reshape(1, D).astype(F32))
    return out.reshape(lead + (D,))


def _normalize_kernel(x_ref, m_ref, s_ref, o_ref):
    o_ref[...] = (x_ref[...] - m_ref[...]) / s_ref[...]


def pallas_normalize(img, mean, std):
    C, H, W = img.shape
    out = pl.pallas_call(
        _normalize_kernel,
        out_shape=jax.ShapeDtypeStruct((C, H * W), F32),
        in_specs=[VMEM_SPEC, VMEM_SPEC, VMEM_SPEC],
        out_specs=VMEM_SPEC,
    )(img.reshape(C, H * W).astype(F32),
      mean.reshape(C, 1).astype(F32),
      std.reshape(C, 1).astype(F32))
    return out.reshape(C, H, W)


# ------------------------------------------------------------------
# Fused ViT encoder block kernel (grid over batch, "parallel")
# ------------------------------------------------------------------
def _enc_block_kernel(num_heads, x_ref, l1w, l1b, qkvw, qkvb, pw, pb,
                      l2w, l2b, m1w, m1b, m2w, m2b, o_ref):
    x = x_ref[0].astype(jnp.float32)                   # (N, ED)
    ED = x.shape[-1]
    xn = _ln(x, l1w[...], l1b[...], 1e-6)
    qkv = _mm(xn, qkvw[...]) + qkvb[...]               # (N, 3*ED)
    q = qkv[:, :ED]
    k = qkv[:, ED:2 * ED]
    v = qkv[:, 2 * ED:]
    attn = _mha(q, k, v, num_heads)                    # (N, ED)
    x = x + _mm(attn, pw[...]) + pb[...]
    xn = _ln(x, l2w[...], l2b[...], 1e-6)
    h = _gelu(_mm(xn, m1w[...]) + m1b[...])
    x = x + _mm(h, m2w[...]) + m2b[...]
    o_ref[0] = x.astype(o_ref.dtype)


def encoder_block_forward(blk, x):
    B, N, ED = x.shape
    weights = [blk["ln1_w"], blk["ln1_b"], blk["qkv_w"], blk["qkv_b"],
               blk["proj_w"], blk["proj_b"], blk["ln2_w"], blk["ln2_b"],
               blk["mlp1_w"], blk["mlp1_b"], blk["mlp2_w"], blk["mlp2_b"]]
    data_spec = pl.BlockSpec((1, N, ED), lambda b: (b, 0, 0))
    return pl.pallas_call(
        partial(_enc_block_kernel, CFG["enc_num_heads"]),
        grid=(B,),
        out_shape=jax.ShapeDtypeStruct((B, N, ED), F32),
        in_specs=[data_spec] + [_w_spec(w) for w in weights],
        out_specs=data_spec,
        compiler_params=PARALLEL_1D,
    )(x.astype(F32), *weights)


# ------------------------------------------------------------------
# Fused neck kernel: 1x1 conv + LN + 3x3 conv (9 shifted matmuls) + LN
# ------------------------------------------------------------------
def _make_shift_mats(G):
    """(9, G*G, G*G) 0/1 matrices implementing a padded 3x3 shift as a matmul."""
    N = G * G
    mats = np.zeros((9, N, N), np.float32)
    for kh in range(3):
        for kw in range(3):
            k = kh * 3 + kw
            for r in range(G):
                for c in range(G):
                    rr, cc = r + kh - 1, c + kw - 1
                    if 0 <= rr < G and 0 <= cc < G:
                        mats[k, r * G + c, rr * G + cc] = 1.0
    return jnp.asarray(mats)


def _neck_kernel(x_ref, c1w_ref, l1w_ref, l1b_ref, shift_ref, c2w_ref,
                 l2w_ref, l2b_ref, o_ref):
    x = x_ref[0].astype(jnp.float32)                   # (N, ED)
    y = _mm(x, c1w_ref[...])                           # (N, OC) -- conv1x1, no bias
    y = _ln(y, l1w_ref[...], l1b_ref[...], 1e-6)
    shifts = shift_ref[...]                            # (9, N, N)
    c2w = c2w_ref[...]                                 # (9, OC, OC)
    acc = jnp.zeros_like(y)
    for kidx in range(9):
        ys = jnp.dot(shifts[kidx], y, preferred_element_type=jnp.float32)
        acc = acc + _mm(ys, c2w[kidx])
    y = _ln(acc, l2w_ref[...], l2b_ref[...], 1e-6)
    o_ref[0] = y.astype(o_ref.dtype)


def neck_forward(p, x, shift_mats):
    B, N, ED = x.shape
    OC = CFG["out_chans"]
    weights = [p["neck_conv1_w"], p["neck_ln1_w"], p["neck_ln1_b"],
               shift_mats, p["neck_conv2_w"], p["neck_ln2_w"], p["neck_ln2_b"]]
    return pl.pallas_call(
        _neck_kernel,
        grid=(B,),
        out_shape=jax.ShapeDtypeStruct((B, N, OC), F32),
        in_specs=[pl.BlockSpec((1, N, ED), lambda b: (b, 0, 0))] +
                 [_w_spec(w) for w in weights],
        out_specs=pl.BlockSpec((1, N, OC), lambda b: (b, 0, 0)),
        compiler_params=PARALLEL_1D,
    )(x.astype(F32), *weights)


# ------------------------------------------------------------------
# Image encoder (ViT)
# ------------------------------------------------------------------
def image_encoder_forward(p, x_nchw):
    B = x_nchw.shape[0]
    P = CFG["patch_size"]
    S = CFG["img_size"]
    G = S // P
    ED = CFG["enc_embed_dim"]
    N = G * G

    # patch embed: Conv2d(3, ED, k=P, s=P) as reshape + matmul (bias fused)
    xp = (x_nchw.reshape(B, 3, G, P, G, P)
          .transpose(0, 2, 4, 1, 3, 5)
          .reshape(B * G * G, 3 * P * P))
    x = pallas_linear(xp, p["patch_w"], p["patch_b"]).reshape(B, G, G, ED)
    x = x + p["pos_embed"]
    x = x.reshape(B, N, ED)

    for blk in p["blocks"]:
        x = encoder_block_forward(blk, x)

    shift_mats = _make_shift_mats(G)
    x = neck_forward(p, x, shift_mats)                 # (B, N, OC)
    return x.reshape(B, G, G, CFG["out_chans"])        # channels-last


# ------------------------------------------------------------------
# Prompt encoder
# ------------------------------------------------------------------
TWO_PI = 2.0 * math.pi


def _pe_encoding(pp, coords01):
    c = 2.0 * coords01 - 1.0
    c = c @ pp["pe_gaussian"]          # tiny (.,2)x(2,C/2) matmul: JAX glue
    c = TWO_PI * c
    return jnp.concatenate([jnp.sin(c), jnp.cos(c)], axis=-1)


def get_dense_pe(pp):
    G = CFG["img_size"] // CFG["patch_size"]
    y = (jnp.arange(G, dtype=F32) + 0.5) / G
    x = (jnp.arange(G, dtype=F32) + 0.5) / G
    yy, xx = jnp.meshgrid(y, x, indexing="ij")
    coords = jnp.stack([xx, yy], axis=-1)
    return _pe_encoding(pp, coords)[None]              # (1, G, G, C)


def embed_points(pp, points, labels, pad):
    S = CFG["img_size"]
    points = points + 0.5
    if pad:
        points = jnp.concatenate([points, jnp.zeros((points.shape[0], 1, 2), F32)], axis=1)
        labels = jnp.concatenate([labels, -jnp.ones((labels.shape[0], 1), labels.dtype)], axis=1)
    emb = _pe_encoding(pp, points / jnp.array([S, S], F32))
    lab = labels[..., None]
    emb = jnp.where(lab == -1, 0.0, emb)
    emb = emb + jnp.where(lab == -1, pp["not_a_point"], 0.0)
    emb = emb + jnp.where(lab == 0, pp["point_embeddings"][0], 0.0)
    emb = emb + jnp.where(lab == 1, pp["point_embeddings"][1], 0.0)
    return emb


def embed_boxes(pp, boxes):
    S = CFG["img_size"]
    coords = (boxes + 0.5).reshape(-1, 2, 2) / jnp.array([S, S], F32)
    emb = _pe_encoding(pp, coords)
    emb = emb.at[:, 0, :].add(pp["point_embeddings"][2])
    emb = emb.at[:, 1, :].add(pp["point_embeddings"][3])
    return emb


def prompt_encoder_forward(pp, points=None, boxes=None, masks=None):
    G = CFG["img_size"] // CFG["patch_size"]
    C = CFG["out_chans"]
    if points is not None:
        bs = points[0].shape[0]
    elif boxes is not None:
        bs = boxes.shape[0]
    else:
        bs = 1
    sparse = jnp.zeros((bs, 0, C), F32)
    if points is not None:
        coords, labels = points
        sparse = jnp.concatenate(
            [sparse, embed_points(pp, coords, labels, pad=(boxes is None))], axis=1)
    if boxes is not None:
        sparse = jnp.concatenate([sparse, embed_boxes(pp, boxes)], axis=1)
    # TODO(synk): mask_downscaling Conv2d stack not implemented; example inputs carry no mask_inputs.
    dense = jnp.broadcast_to(pp["no_mask_embed"].reshape(1, 1, 1, C), (bs, G, G, C))
    return sparse, dense


# ------------------------------------------------------------------
# Mask decoder: fused TwoWayTransformer layer / final attention / heads
# ------------------------------------------------------------------
def _twoway_layer_kernel(num_heads, skip_pe,
                         q_ref, k_ref, qpe_ref, kpe_ref,
                         saw, sab, saow, saob, l1w, l1b,
                         t2iw, t2ib, t2iow, t2iob, l2w, l2b,
                         m1w, m1b, m2w, m2b, l3w, l3b,
                         i2tw, i2tb, i2tow, i2tob, l4w, l4b,
                         qo_ref, ko_ref):
    queries = q_ref[0].astype(jnp.float32)             # (Nt, C)
    keys = k_ref[0].astype(jnp.float32)                # (Nk, C)
    qpe = qpe_ref[0].astype(jnp.float32)
    kpe = kpe_ref[0].astype(jnp.float32)

    if skip_pe:
        queries = _proj_attn(queries, queries, queries,
                             saw[...], sab[...], saow[...], saob[...], num_heads)
    else:
        q = queries + qpe
        queries = queries + _proj_attn(q, q, queries,
                                       saw[...], sab[...], saow[...], saob[...], num_heads)
    queries = _ln(queries, l1w[...], l1b[...], 1e-5)

    q = queries + qpe
    k = keys + kpe
    queries = queries + _proj_attn(q, k, keys,
                                   t2iw[...], t2ib[...], t2iow[...], t2iob[...], num_heads)
    queries = _ln(queries, l2w[...], l2b[...], 1e-5)

    h = jnp.maximum(_mm(queries, m1w[...]) + m1b[...], 0.0)
    queries = _ln(queries + _mm(h, m2w[...]) + m2b[...], l3w[...], l3b[...], 1e-5)

    q = queries + qpe
    k = keys + kpe
    keys = keys + _proj_attn(k, q, queries,
                             i2tw[...], i2tb[...], i2tow[...], i2tob[...], num_heads)
    keys = _ln(keys, l4w[...], l4b[...], 1e-5)

    qo_ref[0] = queries.astype(qo_ref.dtype)
    ko_ref[0] = keys.astype(ko_ref.dtype)


def twoway_layer_forward(layer, queries, keys, qpe, kpe, num_heads, skip_pe):
    Bp, Nt, C = queries.shape
    Nk = keys.shape[1]
    sa, t2i, i2t = layer["self_attn"], layer["cross_t2i"], layer["cross_i2t"]
    weights = [sa["qkv_w"], sa["qkv_b"], sa["o_w"], sa["o_b"],
               layer["ln1_w"], layer["ln1_b"],
               t2i["qkv_w"], t2i["qkv_b"], t2i["o_w"], t2i["o_b"],
               layer["ln2_w"], layer["ln2_b"],
               layer["mlp1_w"], layer["mlp1_b"], layer["mlp2_w"], layer["mlp2_b"],
               layer["ln3_w"], layer["ln3_b"],
               i2t["qkv_w"], i2t["qkv_b"], i2t["o_w"], i2t["o_b"],
               layer["ln4_w"], layer["ln4_b"]]
    q_spec = pl.BlockSpec((1, Nt, C), lambda b: (b, 0, 0))
    k_spec = pl.BlockSpec((1, Nk, C), lambda b: (b, 0, 0))
    q_out, k_out = pl.pallas_call(
        partial(_twoway_layer_kernel, num_heads, skip_pe),
        grid=(Bp,),
        out_shape=(jax.ShapeDtypeStruct((Bp, Nt, C), F32),
                   jax.ShapeDtypeStruct((Bp, Nk, C), F32)),
        in_specs=[q_spec, k_spec, q_spec, k_spec] + [_w_spec(w) for w in weights],
        out_specs=(q_spec, k_spec),
        compiler_params=PARALLEL_1D,
    )(queries.astype(F32), keys.astype(F32), qpe.astype(F32), kpe.astype(F32), *weights)
    return q_out, k_out


def _final_attn_kernel(num_heads, q_ref, k_ref, qpe_ref, kpe_ref,
                       w_ref, b_ref, ow_ref, ob_ref, lnw_ref, lnb_ref, o_ref):
    queries = q_ref[0].astype(jnp.float32)
    keys = k_ref[0].astype(jnp.float32)
    qpe = qpe_ref[0].astype(jnp.float32)
    kpe = kpe_ref[0].astype(jnp.float32)
    q = queries + qpe
    k = keys + kpe
    att = _proj_attn(q, k, keys, w_ref[...], b_ref[...], ow_ref[...], ob_ref[...], num_heads)
    out = _ln(queries + att, lnw_ref[...], lnb_ref[...], 1e-5)
    o_ref[0] = out.astype(o_ref.dtype)


def final_attn_forward(dp, queries, keys, qpe, kpe, num_heads):
    Bp, Nt, C = queries.shape
    Nk = keys.shape[1]
    fa = dp["final_attn"]
    weights = [fa["qkv_w"], fa["qkv_b"], fa["o_w"], fa["o_b"],
               dp["ln_final_w"], dp["ln_final_b"]]
    q_spec = pl.BlockSpec((1, Nt, C), lambda b: (b, 0, 0))
    k_spec = pl.BlockSpec((1, Nk, C), lambda b: (b, 0, 0))
    return pl.pallas_call(
        partial(_final_attn_kernel, num_heads),
        grid=(Bp,),
        out_shape=jax.ShapeDtypeStruct((Bp, Nt, C), F32),
        in_specs=[q_spec, k_spec, q_spec, k_spec] + [_w_spec(w) for w in weights],
        out_specs=q_spec,
        compiler_params=PARALLEL_1D,
    )(queries.astype(F32), keys.astype(F32), qpe.astype(F32), kpe.astype(F32), *weights)


def _heads_kernel(num_mask_tokens,
                  hs_ref, up_ref,
                  hw1, hb1, hw2, hb2, hw3, hb3,
                  iw1, ib1, iw2, ib2, iw3, ib3,
                  masks_ref, iou_ref):
    hs = hs_ref[0].astype(jnp.float32)                 # (Nt, C)
    up = up_ref[0].astype(jnp.float32)                 # (HW, C//8)
    w1, b1 = hw1[...], hb1[...]
    w2, b2 = hw2[...], hb2[...]
    w3, b3 = hw3[...], hb3[...]

    rows = []
    for i in range(num_mask_tokens):
        t = hs[1 + i:2 + i, :]                         # (1, C)
        t = jnp.maximum(_mm(t, w1[i]) + b1[i], 0.0)
        t = jnp.maximum(_mm(t, w2[i]) + b2[i], 0.0)
        t = _mm(t, w3[i]) + b3[i]                      # (1, C//8)
        rows.append(t)
    hyper_in = jnp.concatenate(rows, axis=0)           # (T, C//8)
    masks = jax.lax.dot_general(hyper_in.astype(BF16), up.astype(BF16),
                                (((1,), (1,)), ((), ())),
                                preferred_element_type=jnp.float32)   # (T, HW)
    masks_ref[0] = masks.astype(masks_ref.dtype)

    t = hs[0:1, :]
    t = jnp.maximum(_mm(t, iw1[...]) + ib1[...], 0.0)
    t = jnp.maximum(_mm(t, iw2[...]) + ib2[...], 0.0)
    iou_ref[0] = (_mm(t, iw3[...]) + ib3[...]).astype(iou_ref.dtype)


def heads_forward(dp, hs, up_flat, num_mask_tokens):
    Bp, Nt, C = hs.shape
    HW, C8 = up_flat.shape[1], up_flat.shape[2]
    weights = [dp["hyper_w1"], dp["hyper_b1"], dp["hyper_w2"], dp["hyper_b2"],
               dp["hyper_w3"], dp["hyper_b3"],
               dp["iou_w1"], dp["iou_b1"], dp["iou_w2"], dp["iou_b2"],
               dp["iou_w3"], dp["iou_b3"]]
    masks, iou = pl.pallas_call(
        partial(_heads_kernel, num_mask_tokens),
        grid=(Bp,),
        out_shape=(jax.ShapeDtypeStruct((Bp, num_mask_tokens, HW), F32),
                   jax.ShapeDtypeStruct((Bp, 1, num_mask_tokens), F32)),
        in_specs=[pl.BlockSpec((1, Nt, C), lambda b: (b, 0, 0)),
                  pl.BlockSpec((1, HW, C8), lambda b: (b, 0, 0))] +
                 [_w_spec(w) for w in weights],
        out_specs=(pl.BlockSpec((1, num_mask_tokens, HW), lambda b: (b, 0, 0)),
                   pl.BlockSpec((1, 1, num_mask_tokens), lambda b: (b, 0, 0))),
        compiler_params=PARALLEL_1D,
    )(hs.astype(F32), up_flat.astype(F32), *weights)
    return masks, iou[:, 0, :]


def conv_transpose_2x(x, w_mat, b, out_ch, act="none"):
    """ConvTranspose2d(k=2, s=2) on channels-last x: matmul (bias + act fused)
    followed by a tiny pixel-shuffle in JAX glue."""
    B, H, W, Cin = x.shape
    b_tiled = jnp.tile(b, 4)                           # bias folded into the kernel
    y = pallas_linear(x.reshape(B * H * W, Cin), w_mat, b_tiled, act=act)
    y = y.reshape(B, H, W, 2, 2, out_ch).transpose(0, 1, 3, 2, 4, 5)
    return y.reshape(B, 2 * H, 2 * W, out_ch)


def mask_decoder_forward(dp, image_embedding, image_pe, sparse, dense, multimask_output):
    C = CFG["out_chans"]
    G = CFG["img_size"] // CFG["patch_size"]
    T = CFG["num_multimask_outputs"] + 1
    H = CFG["dec_num_heads"]
    N = G * G
    Bp = sparse.shape[0]

    output_tokens = jnp.concatenate([dp["iou_token"], dp["mask_tokens"]], axis=0)
    output_tokens = jnp.broadcast_to(output_tokens[None], (Bp, 1 + T, C))
    tokens = jnp.concatenate([output_tokens, sparse], axis=1)          # (Bp, Nt, C)

    src = jnp.broadcast_to(image_embedding, (Bp, G, G, C)) + dense
    pos_src = jnp.broadcast_to(image_pe, (Bp, G, G, C))

    queries = tokens
    keys = src.reshape(Bp, N, C)
    qpe = tokens
    kpe = pos_src.reshape(Bp, N, C)

    for idx, layer in enumerate(dp["layers"]):
        queries, keys = twoway_layer_forward(layer, queries, keys, qpe, kpe,
                                             num_heads=H, skip_pe=(idx == 0))

    hs = final_attn_forward(dp, queries, keys, qpe, kpe, num_heads=H)  # (Bp, Nt, C)

    src_img = keys.reshape(Bp, G, G, C)
    up = conv_transpose_2x(src_img, dp["up1_w"], dp["up1_b"], C // 4)
    up = pallas_layernorm(up, dp["up_ln_w"], dp["up_ln_b"], eps=1e-6, act="gelu")
    up = conv_transpose_2x(up, dp["up2_w"], dp["up2_b"], C // 8, act="gelu")
    up_flat = up.reshape(Bp, (4 * G) * (4 * G), C // 8)

    masks, iou_pred = heads_forward(dp, hs, up_flat, T)
    masks = masks.reshape(Bp, T, 4 * G, 4 * G)

    if multimask_output:
        return masks[:, 1:, :, :], iou_pred[:, 1:]
    return masks[:, 0:1, :, :], iou_pred[:, 0:1]


# ------------------------------------------------------------------
# Pre / post processing
# ------------------------------------------------------------------
def preprocess(img):
    S = CFG["img_size"]
    x = pallas_normalize(img, PIXEL_MEAN, PIXEL_STD)
    h, w = x.shape[-2:]
    return jnp.pad(x, ((0, 0), (0, S - h), (0, S - w)))


def _bilinear_matrix(out_size, in_size):
    i = np.arange(out_size, dtype=np.float64)
    src = (i + 0.5) * (in_size / out_size) - 0.5
    src = np.clip(src, 0.0, in_size - 1)
    lo = np.floor(src).astype(np.int64)
    hi = np.minimum(lo + 1, in_size - 1)
    w_hi = (src - lo).astype(np.float32)
    W = np.zeros((out_size, in_size), np.float32)
    W[np.arange(out_size), lo] += 1.0 - w_hi
    W[np.arange(out_size), hi] += w_hi
    return jnp.asarray(W)


def _resize_kernel(x_ref, wh_ref, wwt_ref, o_ref):
    x = x_ref[0].astype(jnp.float32)                   # (H, W)
    t = jnp.dot(x, wwt_ref[...], preferred_element_type=jnp.float32)    # (H, ow)
    o_ref[0] = jnp.dot(wh_ref[...], t, preferred_element_type=jnp.float32)


def resize_bilinear(x, out_hw):
    """Bilinear (align_corners=False) resize: Wh @ X @ Ww^T fused per plane."""
    B, C, H, W = x.shape
    oh, ow = out_hw
    Wh = _bilinear_matrix(oh, H)                       # (oh, H)
    WwT = _bilinear_matrix(ow, W).T                    # (W, ow)
    N = B * C
    xr = x.reshape(N, H, W).astype(F32)
    out = pl.pallas_call(
        _resize_kernel,
        grid=(N,),
        out_shape=jax.ShapeDtypeStruct((N, oh, ow), F32),
        in_specs=[pl.BlockSpec((1, H, W), lambda n: (n, 0, 0)),
                  _w_spec(Wh), _w_spec(WwT)],
        out_specs=pl.BlockSpec((1, oh, ow), lambda n: (n, 0, 0)),
        compiler_params=PARALLEL_1D,
    )(xr, Wh, WwT)
    return out.reshape(B, C, oh, ow)


def postprocess_masks(low_res_masks, input_size, original_size):
    S = CFG["img_size"]
    masks = resize_bilinear(low_res_masks, (S, S))
    masks = masks[..., :input_size[0], :input_size[1]]
    return resize_bilinear(masks, original_size)


# ------------------------------------------------------------------
# Parameter init (deterministic, synthetic)
# ------------------------------------------------------------------
class KeyGen:
    def __init__(self, key):
        self.key = key

    def __call__(self):
        self.key, sub = jax.random.split(self.key)
        return sub


def init_params(key):
    kg = KeyGen(key)

    def w(shape, scale=0.02):
        return scale * jax.random.normal(kg(), shape, F32)

    zeros = lambda s: jnp.zeros(s, F32)
    ones = lambda s: jnp.ones(s, F32)

    ED = CFG["enc_embed_dim"]
    OC = CFG["out_chans"]
    P = CFG["patch_size"]
    G = CFG["img_size"] // P
    MLP_E = ED * CFG["enc_mlp_ratio"]

    enc_blocks = []
    for _ in range(CFG["enc_depth"]):
        enc_blocks.append(dict(
            ln1_w=ones((1, ED)), ln1_b=zeros((1, ED)),
            qkv_w=w((ED, 3 * ED)), qkv_b=zeros((1, 3 * ED)),
            proj_w=w((ED, ED)), proj_b=zeros((1, ED)),
            ln2_w=ones((1, ED)), ln2_b=zeros((1, ED)),
            mlp1_w=w((ED, MLP_E)), mlp1_b=zeros((1, MLP_E)),
            mlp2_w=w((MLP_E, ED)), mlp2_b=zeros((1, ED)),
        ))
    encoder = dict(
        patch_w=w((CFG["in_chans"] * P * P, ED)), patch_b=zeros((ED,)),
        pos_embed=w((1, G, G, ED)),
        blocks=enc_blocks,
        neck_conv1_w=w((ED, OC)),
        neck_ln1_w=ones((1, OC)), neck_ln1_b=zeros((1, OC)),
        neck_conv2_w=w((9, OC, OC)),
        neck_ln2_w=ones((1, OC)), neck_ln2_b=zeros((1, OC)),
    )

    prompt = dict(
        pe_gaussian=jax.random.normal(kg(), (2, OC // 2), F32),
        point_embeddings=w((4, OC), 1.0),
        not_a_point=w((OC,), 1.0),
        no_mask_embed=w((OC,), 1.0),
    )

    C = OC

    def dec_attn(downsample):
        ci = C // downsample
        return dict(qkv_w=w((3, C, ci)), qkv_b=zeros((3, ci)),
                    o_w=w((ci, C)), o_b=zeros((1, C)))

    MLPD = CFG["dec_mlp_dim"]
    dec_layers = []
    for _ in range(CFG["dec_depth"]):
        dec_layers.append(dict(
            self_attn=dec_attn(1),
            ln1_w=ones((1, C)), ln1_b=zeros((1, C)),
            cross_t2i=dec_attn(2),
            ln2_w=ones((1, C)), ln2_b=zeros((1, C)),
            mlp1_w=w((C, MLPD)), mlp1_b=zeros((1, MLPD)),
            mlp2_w=w((MLPD, C)), mlp2_b=zeros((1, C)),
            ln3_w=ones((1, C)), ln3_b=zeros((1, C)),
            ln4_w=ones((1, C)), ln4_b=zeros((1, C)),
            cross_i2t=dec_attn(2),
        ))

    T = CFG["num_multimask_outputs"] + 1
    HID = CFG["iou_head_hidden_dim"]
    decoder = dict(
        iou_token=w((1, C), 1.0), mask_tokens=w((T, C), 1.0),
        layers=dec_layers,
        final_attn=dec_attn(2),
        ln_final_w=ones((1, C)), ln_final_b=zeros((1, C)),
        up1_w=w((C, 4 * (C // 4))), up1_b=zeros((C // 4,)),
        up_ln_w=ones((C // 4,)), up_ln_b=zeros((C // 4,)),
        up2_w=w((C // 4, 4 * (C // 8))), up2_b=zeros((C // 8,)),
        hyper_w1=w((T, C, C)), hyper_b1=zeros((T, C)),
        hyper_w2=w((T, C, C)), hyper_b2=zeros((T, C)),
        hyper_w3=w((T, C, C // 8)), hyper_b3=zeros((T, C // 8)),
        iou_w1=w((C, HID)), iou_b1=zeros((1, HID)),
        iou_w2=w((HID, HID)), iou_b2=zeros((1, HID)),
        iou_w3=w((HID, T)), iou_b3=zeros((1, T)),
    )
    return dict(encoder=encoder, prompt=prompt, decoder=decoder)


# ------------------------------------------------------------------
# Full SAM forward (jitted encoder + jitted per-record decode pipeline)
# ------------------------------------------------------------------
def _decode_record(params, curr_embedding, point_coords, point_labels, boxes,
                   input_size, original_size, multimask_output):
    image_pe = get_dense_pe(params["prompt"])
    points = (point_coords, point_labels) if point_coords is not None else None
    sparse, dense = prompt_encoder_forward(params["prompt"], points=points,
                                           boxes=boxes, masks=None)
    low_res_masks, iou_pred = mask_decoder_forward(
        params["decoder"], curr_embedding, image_pe, sparse, dense, multimask_output)
    masks = postprocess_masks(low_res_masks, input_size, original_size)
    return masks, iou_pred, low_res_masks


_preprocess_jit = jax.jit(preprocess)
_encode_jit = jax.jit(image_encoder_forward)
_decode_jit = jax.jit(_decode_record,
                      static_argnames=("input_size", "original_size", "multimask_output"))


def sam_forward(params, batched_input, multimask_output):
    input_images = jnp.stack([_preprocess_jit(rec["image"]) for rec in batched_input], axis=0)
    image_embeddings = _encode_jit(params["encoder"], input_images)
    outputs = []
    for i, rec in enumerate(batched_input):
        curr = image_embeddings[i:i + 1]
        pc = rec.get("point_coords", None)
        plab = rec.get("point_labels", None)
        boxes = rec.get("boxes", None)
        masks, iou_pred, low_res_masks = _decode_jit(
            params, curr, pc, plab, boxes,
            input_size=tuple(int(s) for s in rec["image"].shape[-2:]),
            original_size=tuple(int(s) for s in rec["original_size"]),
            multimask_output=multimask_output)
        outputs.append({"masks": masks, "iou_predictions": iou_pred,
                        "low_res_masks": low_res_masks})
    return outputs


# ------------------------------------------------------------------
if __name__ == "__main__":
    key = jax.random.PRNGKey(0)
    kparams, kdata = jax.random.split(key)
    params = init_params(kparams)

    k1, k2, k3, k4 = jax.random.split(kdata, 4)
    img1 = jax.random.uniform(k1, (3, 32, 24), F32) * 255.0
    img2 = jax.random.uniform(k2, (3, 28, 32), F32) * 255.0

    batched_input = [
        dict(image=img1, original_size=(40, 30),
             point_coords=jax.random.uniform(k3, (2, 3, 2), F32) * 24.0,
             point_labels=jnp.array([[1, 0, 1], [0, 1, 1]], jnp.int32),
             boxes=jnp.array([[2.0, 3.0, 20.0, 25.0],
                              [1.0, 1.0, 15.0, 18.0]], F32)),
        dict(image=img2, original_size=(35, 44),
             point_coords=jax.random.uniform(k4, (1, 2, 2), F32) * 28.0,
             point_labels=jnp.array([[1, 0]], jnp.int32)),
    ]

    outputs = sam_forward(params, batched_input, multimask_output=True)
    for out in outputs:
        jax.block_until_ready(out["masks"])
        jax.block_until_ready(out["iou_predictions"])
        jax.block_until_ready(out["low_res_masks"])

    assert outputs[0]["masks"].shape == (2, 3, 40, 30)
    assert outputs[0]["iou_predictions"].shape == (2, 3)
    assert outputs[0]["low_res_masks"].shape == (2, 3, 16, 16)
    assert outputs[1]["masks"].shape == (1, 3, 35, 44)
    print("KERNEL_OK")
</pallas_src>

<mosaic_0001>
module attributes {stable_mosaic.version = 11 : i64} {
  func.func @_normalize_kernel(%arg0: memref<3x768xf32, #tpu.memory_space<vmem>>, %arg1: memref<3x1xf32, #tpu.memory_space<vmem>>, %arg2: memref<3x1xf32, #tpu.memory_space<vmem>>, %arg3: memref<3x768xf32, #tpu.memory_space<vmem>>) attributes {dimension_semantics = [], scalar_prefetch = 0 : i64, scratch_operands = 0 : i64, tpu.core_type = #tpu.core_type<tc>} {
    %c0 = arith.constant 0 : index
    %c0_0 = arith.constant 0 : index
    %0 = vector.load %arg0[%c0, %c0_0] : memref<3x768xf32, #tpu.memory_space<vmem>>, vector<3x768xf32>
    %c0_1 = arith.constant 0 : index
    %c0_2 = arith.constant 0 : index
    %1 = vector.load %arg1[%c0_1, %c0_2] : memref<3x1xf32, #tpu.memory_space<vmem>>, vector<3x1xf32>
    %2 = vector.broadcast %1 : vector<3x1xf32> to vector<3x768xf32>
    %3 = arith.subf %0, %2 : vector<3x768xf32>
    %c0_3 = arith.constant 0 : index
    %c0_4 = arith.constant 0 : index
    %4 = vector.load %arg2[%c0_3, %c0_4] : memref<3x1xf32, #tpu.memory_space<vmem>>, vector<3x1xf32>
    %5 = vector.broadcast %4 : vector<3x1xf32> to vector<3x768xf32>
    %6 = arith.divf %3, %5 : vector<3x768xf32>
    %c0_5 = arith.constant 0 : index
    %c0_6 = arith.constant 0 : index
    %7 = vector.load %arg3[%c0_5, %c0_6] : memref<3x768xf32, #tpu.memory_space<vmem>>, vector<3x768xf32>
    tpu.vector_store %arg3[%c0_5, %c0_6], %6 {strides = array<i32>} : memref<3x768xf32, #tpu.memory_space<vmem>>, vector<3x768xf32>,
    return
  }
}

</mosaic_0001>

<llo_original>
// kernel: preprocess.1
$region0: #{preprocess.1}
  #allocation0 [shape = 'u32[]', space=smem, size = 0x4, offset = 0x4, fixed_abs, tag = 'smem constant byte address 0x4 - core index']
  #allocation1 [shape = 'u32[72,128]{1,0:T(1,128)}', space=vmem, size = 0x9000, scoped, tag = 'internal scratch']
  %s0 = inlined_call_operand.vmem [shape: f32[3,768], index: 0, kind: input, shape index: {}]
  %s1 = inlined_call_operand.vmem [shape: f32[3,1], index: 1, kind: input, shape index: {}]
  %s2 = inlined_call_operand.vmem [shape: f32[3,1], index: 2, kind: input, shape index: {}]
  %s3 = inlined_call_operand.vmem [shape: f32[3,768], index: 3, kind: output, shape index: {}]
  %s4 = sld [smem:[#allocation0]]
  $region22: #{preprocess.1} parent=0
    _
  %s6 = ssub.s32 1, %s4
  %s7 = scalar_select 0, %s6, %s4
  // Predicated region
  $region2: #{preprocess.1} parent=0 // pred_check
    _
  $region3: #{preprocess.1} parent=0 // pred_check_branch
    %9 = sbr.rel (0) target = $region5
  $region4: #{preprocess.1} parent=0 // pred_region
    _
  $region5: #{preprocess.1} parent=0 // pred_fallthru
    _
  // Predicated region
  $region6: #{preprocess.1} parent=0 // pred_check
    _
  $region7: #{preprocess.1} parent=0 // pred_check_branch
    %11 = sbr.rel (0) target = $region9
  $region8: #{preprocess.1} parent=0 // pred_region
    _
  $region9: #{preprocess.1} parent=0 // pred_fallthru
    _
  // Predicated region
  $region10: #{preprocess.1} parent=0 // pred_check
    _
  $region11: #{preprocess.1} parent=0 // pred_check_branch
    %13 = sbr.rel (0) target = $region13
  $region12: #{preprocess.1} parent=0 // pred_region
    _
  $region13: #{preprocess.1} parent=0 // pred_fallthru
    _
  %v14 = vld [vmem:[%s0] sm:$0x77]
  %v15 = vld [vmem:[%s0 + $0x8] sm:$0x77]
  %v16 = vld [vmem:[%s0 + $0x10] sm:$0x77]
  %v17 = vld [vmem:[%s1] sm:$0x7]
  %19 = vset.pattern.permute.xlu0 0
  %20 = vperm.xlu0 %19, %v17
  %v21 = vpop.permute.xlu0 %20
  %v23 = vunpack.c.l.s4 839922192
  %v24 = vunpack.c.0.s8 %v23
  %v25 = vperm.slane %v21, %v24
  %v27 = vsub.f32 %v14, %v25
  %v28 = vsub.f32 %v15, %v25
  %v29 = vsub.f32 %v16, %v25
  %v30 = vld [vmem:[%s2] sm:$0x7]
  %32 = vset.pattern.permute.xlu0 0
  %33 = vperm.xlu0 %32, %v30
  %v34 = vpop.permute.xlu0 %33
  %v36 = vunpack.c.l.s4 839922192
  %v37 = vunpack.c.0.s8 %v36
  %v38 = vperm.slane %v34, %v37
  %v40 = vrcp.pop %v38
  %v41 = vmul.f32 %v38, %v40
  %v42 = vsub.f32 1.0, %v41
  %v43 = vmul.f32 %v40, %v42
  %v44 = vadd.f32 %v40, %v43
  %vm45 = vweird.f32 %v38
  %vm46 = vweird.f32 %v40
  %vm47 = vmor %vm45, %vm46
  %v48 = vsel %vm47, %v40, %v44
  %v49 = vand.u32 2147483647, %v38
  %vm50 = vcmp.eq.f32.partialorder %v49, 8.507059e+37
  %v51 = vand.u32 %v38, 2147483648
  %v52 = vor.u32 1.1754944e-38, %v51
  %v53 = vsel %vm50, %v52, %v48
  %v54 = vmul.f32 %v27, %v53
  %v55 = vmul.f32 %v28, %v53
  %v56 = vmul.f32 %v29, %v53
  %57 = vst [vmem:[%s3] sm:$0x77] %v54
  %58 = vst [vmem:[%s3 + $0x8] sm:$0x77] %v55
  %59 = vst [vmem:[%s3 + $0x10] sm:$0x77] %v56
  // Predicated region
  $region14: #{preprocess.1} parent=0 // pred_check
    _
  $region15: #{preprocess.1} parent=0 // pred_check_branch
    %61 = sbr.rel (0) target = $region17
  $region16: #{preprocess.1} parent=0 // pred_region
    _
  $region17: #{preprocess.1} parent=0 // pred_fallthru
    _
  // Predicated region
  $region18: #{preprocess.1} parent=0 // pred_check
    _
  $region19: #{preprocess.1} parent=0 // pred_check_branch
    %63 = sbr.rel (0) target = $region21
  $region20: #{preprocess.1} parent=0 // pred_region
    _
  $region21: #{preprocess.1} parent=0 // pred_fallthru
    _

</llo_original>
